<compile_context>
chip_gen: v7x
topology: tpu7x:2x2x1
jax: 0.10.0
libtpu: 0.0.40
codegen_flags: <defaults>
</compile_context>

<pallas_src>
import jax
import jax.numpy as jnp
from jax.experimental import pallas as pl
from jax.experimental.pallas import tpu as pltpu


def _round_up(n, m):
    return ((n + m - 1) // m) * m


def nnhout_kernel(x_ref, w1_ref, b1_ref, w2_ref, b2_ref, o_ref):
    # x arrives as f32 straight from HBM; cast to bf16 right before the dot so the
    # MXU runs bf16 x bf16 with f32 accumulation (cast is VPU work hidden under DMA).
    x = x_ref[...].astype(jnp.bfloat16)
    h = jnp.dot(x, w1_ref[...], preferred_element_type=jnp.float32)
    h = jnp.maximum(h + b1_ref[...], 0.0)  # fc1 + ReLU
    # out: (TM, Cp) f32 @ (Cp, Cp) f32 (tiny, keep full precision).
    y = jnp.dot(h, w2_ref[...], preferred_element_type=jnp.float32) + b2_ref[...]
    # Numerically-stable softmax over the (padded) class dim. Padded classes carry
    # a -1e30 bias so exp underflows to 0. Exact division: the epilogue is hidden
    # under the x DMA, so approx reciprocal buys nothing and costs parity.
    m = jnp.max(y, axis=-1, keepdims=True)
    e = jnp.exp(y - m)
    s = jnp.sum(e, axis=-1, keepdims=True)
    o_ref[...] = (e / s).astype(o_ref.dtype)


def prepare_params(w1, b1, w2, b2):
    """Pad/cast the weights ONCE (hoisted out of the per-call path).

    w1: (D, C), b1: (C,), w2: (C, C), b2: (C,), weights laid out (in, out)
    (transpose PyTorch nn.Linear weights once when importing them).
    Returns (w1_p, b1_p, w2_p, b2_p, num_classes).
    """
    D, C = w1.shape
    Cp = _round_up(max(C, 128), 128)  # lane-dense class dim -> unmasked stores
    w1_p = jnp.zeros((D, Cp), jnp.bfloat16).at[:, :C].set(w1.astype(jnp.bfloat16))
    b1_p = jnp.zeros((1, Cp), jnp.float32).at[0, :C].set(b1.astype(jnp.float32))
    w2_p = jnp.zeros((Cp, Cp), jnp.float32).at[:C, :C].set(w2.astype(jnp.float32))
    # Padded classes get a huge negative logit so softmax assigns them ~0.
    b2_p = jnp.full((1, Cp), -1e30, jnp.float32).at[0, :C].set(b2.astype(jnp.float32))
    return w1_p, b1_p, w2_p, b2_p, C


def nnhout_forward(x, w1_p, b1_p, w2_p, b2_p, num_classes, *, tm=512,
                   out_dtype=jnp.float32):
    """x: (B, D) f32, pre-padded params from prepare_params -> (B, C) softmax probs."""
    B, D = x.shape
    Cp = w1_p.shape[1]

    # Batch tile: default 512 (>=85% of HBM roofline vs ~63% at 256). Keep the grid
    # at >= 2 steps when B allows so the "parallel" batch axis shards across both
    # TensorCores on v7x; never exceed what B needs. Ragged last block is handled by
    # pl.cdiv + masked partial writes (rows are independent, so padded reads are safe).
    TM = min(tm, max(8, _round_up(pl.cdiv(B, 2), 8)))
    grid = (pl.cdiv(B, TM),)

    out = pl.pallas_call(
        nnhout_kernel,
        out_shape=jax.ShapeDtypeStruct((B, Cp), out_dtype),
        grid=grid,
        in_specs=[
            pl.BlockSpec((TM, D), lambda i: (i, 0)),    # x: streamed, unpadded f32
            pl.BlockSpec((D, Cp), lambda i: (0, 0)),    # w1 (bf16): VMEM-resident
            pl.BlockSpec((1, Cp), lambda i: (0, 0)),    # b1: VMEM-resident
            pl.BlockSpec((Cp, Cp), lambda i: (0, 0)),   # w2: VMEM-resident
            pl.BlockSpec((1, Cp), lambda i: (0, 0)),    # b2 (-1e30 on padded classes)
        ],
        out_specs=pl.BlockSpec((TM, Cp), lambda i: (i, 0)),
        compiler_params=pltpu.CompilerParams(
            dimension_semantics=("parallel",),
            # TM=512 @ D=4000 f32: ~18 MiB total (2x8 MiB x buffers + weights + out);
            # 48 MiB leaves headroom under v7x's 64 MiB/TC, and v5e/v6e (128 MiB)
            # can raise `tm` further if the batch is long enough.
            vmem_limit_bytes=48 * 1024 * 1024,
        ),
    )(x, w1_p, b1_p, w2_p, b2_p)

    return out[:, :num_classes]


def make_params(key, input_size, num_classes):
    """Deterministic synthetic params matching nn.Linear shapes (transposed to (in, out))."""
    k1, k2, k3, k4 = jax.random.split(key, 4)
    lim1 = 1.0 / jnp.sqrt(input_size)
    lim2 = 1.0 / jnp.sqrt(num_classes)
    w1 = jax.random.uniform(k1, (input_size, num_classes), jnp.float32, -lim1, lim1)
    b1 = jax.random.uniform(k2, (num_classes,), jnp.float32, -lim1, lim1)
    w2 = jax.random.uniform(k3, (num_classes, num_classes), jnp.float32, -lim2, lim2)
    b2 = jax.random.uniform(k4, (num_classes,), jnp.float32, -lim2, lim2)
    return w1, b1, w2, b2


if __name__ == "__main__":
    key = jax.random.PRNGKey(0)
    batch = 8
    input_size = 32   # small stand-in for the module's default 4000
    num_classes = 2

    kx, kp = jax.random.split(key)
    x = jax.random.normal(kx, (batch, input_size), jnp.float32)
    w1, b1, w2, b2 = make_params(kp, input_size, num_classes)

    # Weight padding/casting done once, outside the per-call path.
    w1_p, b1_p, w2_p, b2_p, C = prepare_params(w1, b1, w2, b2)

    out = jax.block_until_ready(nnhout_forward(x, w1_p, b1_p, w2_p, b2_p, C))

    # Reference uses the same bf16 quantization of x / w1 the kernel applies
    # (bf16 inputs, f32 accumulation on the first matmul); second layer & softmax f32.
    x_q = x.astype(jnp.bfloat16).astype(jnp.float32)
    w1_q = w1.astype(jnp.bfloat16).astype(jnp.float32)
    h_ref = jnp.maximum(x_q @ w1_q + b1, 0.0)
    y_ref = h_ref @ w2 + b2
    ref = jax.nn.softmax(y_ref, axis=-1)

    assert out.shape == (batch, num_classes), "output shape mismatch"
    assert jnp.allclose(out, ref, atol=2e-3, rtol=2e-3), "mismatch vs reference"
    assert jnp.allclose(jnp.sum(out, axis=-1), 1.0, atol=1e-5), "softmax rows must sum to 1"

    print("KERNEL_OK")
</pallas_src>

<mosaic_0001>
module attributes {stable_mosaic.version = 11 : i64} {
  func.func @nnhout_kernel(%arg0: i32, %arg1: memref<8x32xf32, #tpu.memory_space<vmem>>, %arg2: memref<32x128xbf16, #tpu.memory_space<vmem>>, %arg3: memref<1x128xf32, #tpu.memory_space<vmem>>, %arg4: memref<128x128xf32, #tpu.memory_space<vmem>>, %arg5: memref<1x128xf32, #tpu.memory_space<vmem>>, %arg6: memref<8x128xf32, #tpu.memory_space<vmem>>) attributes {dimension_semantics = [#tpu.dimension_semantics<parallel>], iteration_bounds = array<i64: 1>, scalar_prefetch = 0 : i64, scratch_operands = 0 : i64, tpu.core_type = #tpu.core_type<tc>, window_params = [{transform_indices = @transform_0, window_bounds = array<i64: 8, 32>}, {pipeline_mode = #tpu.pipeline_mode<synchronous>, transform_indices = @transform_1, window_bounds = array<i64: 32, 128>}, {pipeline_mode = #tpu.pipeline_mode<synchronous>, transform_indices = @transform_2, window_bounds = array<i64: 1, 128>}, {pipeline_mode = #tpu.pipeline_mode<synchronous>, transform_indices = @transform_3, window_bounds = array<i64: 128, 128>}, {pipeline_mode = #tpu.pipeline_mode<synchronous>, transform_indices = @transform_4, window_bounds = array<i64: 1, 128>}, {transform_indices = @transform_5, window_bounds = array<i64: 8, 128>}]} {
    %c0 = arith.constant 0 : index
    %c0_0 = arith.constant 0 : index
    %0 = vector.load %arg1[%c0, %c0_0] : memref<8x32xf32, #tpu.memory_space<vmem>>, vector<8x32xf32>
    %1 = arith.truncf %0 : vector<8x32xf32> to vector<8x32xbf16>
    %c0_1 = arith.constant 0 : index
    %c0_2 = arith.constant 0 : index
    %2 = vector.load %arg2[%c0_1, %c0_2] : memref<32x128xbf16, #tpu.memory_space<vmem>>, vector<32x128xbf16>
    %cst = arith.constant dense<0.000000e+00> : vector<8x128xf32>
    %3 = tpu.matmul %1, %2, %cst {dimension_numbers = #tpu.dot_dimension_numbers<[1], [0], [0], [1], [0, 0, 1, 1], [], []>} : vector<8x32xbf16>, vector<32x128xbf16>, vector<8x128xf32> -> vector<8x128xf32>
    %c0_3 = arith.constant 0 : index
    %c0_4 = arith.constant 0 : index
    %4 = vector.load %arg3[%c0_3, %c0_4] : memref<1x128xf32, #tpu.memory_space<vmem>>, vector<1x128xf32>
    %5 = vector.broadcast %4 : vector<1x128xf32> to vector<8x128xf32>
    %6 = arith.addf %3, %5 : vector<8x128xf32>
    %cst_5 = arith.constant 0.000000e+00 : f32
    %7 = vector.broadcast %cst_5 : f32 to vector<8x128xf32>
    %8 = arith.maximumf %6, %7 : vector<8x128xf32>
    %c0_6 = arith.constant 0 : index
    %c0_7 = arith.constant 0 : index
    %9 = vector.load %arg4[%c0_6, %c0_7] : memref<128x128xf32, #tpu.memory_space<vmem>>, vector<128x128xf32>
    %cst_8 = arith.constant dense<0.000000e+00> : vector<8x128xf32>
    %10 = tpu.matmul %8, %9, %cst_8 {dimension_numbers = #tpu.dot_dimension_numbers<[1], [0], [0], [1], [0, 0, 1, 1], [], []>} : vector<8x128xf32>, vector<128x128xf32>, vector<8x128xf32> -> vector<8x128xf32>
    %c0_9 = arith.constant 0 : index
    %c0_10 = arith.constant 0 : index
    %11 = vector.load %arg5[%c0_9, %c0_10] : memref<1x128xf32, #tpu.memory_space<vmem>>, vector<1x128xf32>
    %12 = vector.broadcast %11 : vector<1x128xf32> to vector<8x128xf32>
    %13 = arith.addf %10, %12 : vector<8x128xf32>
    %cst_11 = arith.constant dense<0xFF800000> : vector<8xf32>
    %14 = vector.multi_reduction <maximumf>, %13, %cst_11 [1] : vector<8x128xf32> to vector<8xf32>
    %15 = vector.shape_cast %14 : vector<8xf32> to vector<8x1xf32>
    %16 = vector.broadcast %15 : vector<8x1xf32> to vector<8x128xf32>
    %17 = arith.subf %13, %16 : vector<8x128xf32>
    %18 = math.exp %17 : vector<8x128xf32>
    %cst_12 = arith.constant dense<0.000000e+00> : vector<8xf32>
    %19 = vector.multi_reduction <add>, %18, %cst_12 [1] : vector<8x128xf32> to vector<8xf32>
    %20 = vector.shape_cast %19 : vector<8xf32> to vector<8x1xf32>
    %21 = vector.broadcast %20 : vector<8x1xf32> to vector<8x128xf32>
    %22 = arith.divf %18, %21 : vector<8x128xf32>
    %c0_13 = arith.constant 0 : index
    %c0_14 = arith.constant 0 : index
    %23 = vector.load %arg6[%c0_13, %c0_14] : memref<8x128xf32, #tpu.memory_space<vmem>>, vector<8x128xf32>
    tpu.vector_store %arg6[%c0_13, %c0_14], %22 {strides = array<i32>} : memref<8x128xf32, #tpu.memory_space<vmem>>, vector<8x128xf32>,
    return
  }
  func.func @transform_0(%arg0: i32) -> (i32, i32) {
    %c0_i32 = arith.constant 0 : i32
    %c0_i32_0 = arith.constant 0 : i32
    return %arg0, %c0_i32 : i32, i32
  }
  func.func @transform_1(%arg0: i32) -> (i32, i32) {
    %c0_i32 = arith.constant 0 : i32
    %c0_i32_0 = arith.constant 0 : i32
    %c0_i32_1 = arith.constant 0 : i32
    return %c0_i32, %c0_i32_0 : i32, i32
  }
  func.func @transform_2(%arg0: i32) -> (i32, i32) {
    %c0_i32 = arith.constant 0 : i32
    %c0_i32_0 = arith.constant 0 : i32
    %c0_i32_1 = arith.constant 0 : i32
    return %c0_i32, %c0_i32_0 : i32, i32
  }
  func.func @transform_3(%arg0: i32) -> (i32, i32) {
    %c0_i32 = arith.constant 0 : i32
    %c0_i32_0 = arith.constant 0 : i32
    %c0_i32_1 = arith.constant 0 : i32
    return %c0_i32, %c0_i32_0 : i32, i32
  }
  func.func @transform_4(%arg0: i32) -> (i32, i32) {
    %c0_i32 = arith.constant 0 : i32
    %c0_i32_0 = arith.constant 0 : i32
    %c0_i32_1 = arith.constant 0 : i32
    return %c0_i32, %c0_i32_0 : i32, i32
  }
  func.func @transform_5(%arg0: i32) -> (i32, i32) {
    %c0_i32 = arith.constant 0 : i32
    %c0_i32_0 = arith.constant 0 : i32
    return %arg0, %c0_i32 : i32, i32
  }
}

</mosaic_0001>

<llo_original>
// kernel: tpu_custom_call.1
$region0: #{tpu_custom_call.1}
  #allocation0 [shape = 'u32[]', space=smem, size = 0x4, offset = 0x4, fixed_abs, tag = 'smem constant byte address 0x4 - core index']
  #allocation1 [shape = 'u32[144,128]{1,0:T(1,128)}', space=vmem, size = 0x12000, scoped, tag = 'internal scratch']
  %s0 = inlined_call_operand.hbm [shape: f32[8,32], index: 0, kind: input, shape index: {}]
  %s1 = inlined_call_operand.hbm [shape: bf16[32,128], index: 1, kind: input, shape index: {}]
  %s2 = inlined_call_operand.vmem [shape: f32[1,128], index: 2, kind: input, shape index: {}]
  %s3 = inlined_call_operand.hbm [shape: f32[128,128], index: 3, kind: input, shape index: {}]
  %s4 = inlined_call_operand.vmem [shape: f32[1,128], index: 4, kind: input, shape index: {}]
  %s5 = inlined_call_operand.hbm [shape: f32[8,128], index: 5, kind: output, shape index: {}]
  %s6 = sld [smem:[#allocation0]]
  $region42: #{tpu_custom_call.1} parent=0
    _
  %s8 = ssub.s32 1, %s6
  %s9 = scalar_select 0, %s8, %s6
  $region1: #{tpu_custom_call.1} parent=0
    #allocation2 [shape = 'u8[4096]{0}', space=vmem, size = 0x1000, scoped, tag = 'input window, operand 0, single buffered']
    #allocation3 [shape = 's32[1]{0}', space=sflag, size = 0x4, scoped, tag = 'scoped memory for tpu_custom_call.1']
    #allocation4 [shape = 's32[1]{0}', space=sflag, size = 0x4, scoped, tag = 'scoped memory for tpu_custom_call.1']
    #allocation5 [shape = 'u8[8192]{0}', space=vmem, size = 0x2000, scoped, tag = 'input window, operand 1, single buffered']
    #allocation6 [shape = 's32[1]{0}', space=sflag, size = 0x4, scoped, tag = 'scoped memory for tpu_custom_call.1']
    #allocation7 [shape = 'u8[65536]{0}', space=vmem, size = 0x10000, scoped, tag = 'input window, operand 3, single buffered']
    #allocation8 [shape = 'u8[4096]{0}', space=vmem, size = 0x1000, scoped, tag = 'output window, operand 0, single buffered']
    %10 = vsyncpa [#allocation3], 0
    %11 = vsyncpa [#allocation6], 0
    %12 = vsyncpa [#allocation4], 0
    // Predicated region
    $region2: #{tpu_custom_call.1} parent=1 // pred_check
      _
    $region3: #{tpu_custom_call.1} parent=1 // pred_check_branch
      %14 = sbr.rel (0) target = $region5
    $region4: #{tpu_custom_call.1} parent=1 // pred_region
      %s16 = ssub.s32 128, 128
      %17 = vsyncadd [#allocation3], %s16
      %s19 = sshll.u32 [#allocation2], 4
      %s20 = int_to_ptr.vmem [resolvable:$true] %s19
      %22 = dma.hbm_to_vmem [thread:$0]  %s0, 128, %s20, [#allocation3]
    $region5: #{tpu_custom_call.1} parent=1 // pred_fallthru
      _
    // Predicated region
    $region6: #{tpu_custom_call.1} parent=1 // pred_check
      _
    $region7: #{tpu_custom_call.1} parent=1 // pred_check_branch
      %24 = sbr.rel (0) target = $region9
    $region8: #{tpu_custom_call.1} parent=1 // pred_region
      %s26 = ssub.s32 256, 256
      %27 = vsyncadd [#allocation6], %s26
      %s28 = sshll.u32 [#allocation5], 4
      %s29 = int_to_ptr.vmem [resolvable:$true] %s28
      %34 = dma.hbm_to_vmem [thread:$0]  %s1, 256, %s29, [#allocation6], 64, 64, 4
    $region9: #{tpu_custom_call.1} parent=1 // pred_fallthru
      _
    // Predicated region
    $region10: #{tpu_custom_call.1} parent=1 // pred_check
      _
    $region11: #{tpu_custom_call.1} parent=1 // pred_check_branch
      %36 = sbr.rel (0) target = $region13
    $region12: #{tpu_custom_call.1} parent=1 // pred_region
      _
    $region13: #{tpu_custom_call.1} parent=1 // pred_fallthru
      _
    // Predicated region
    $region14: #{tpu_custom_call.1} parent=1 // pred_check
      _
    $region15: #{tpu_custom_call.1} parent=1 // pred_check_branch
      %38 = sbr.rel (0) target = $region17
    $region16: #{tpu_custom_call.1} parent=1 // pred_region
      %s40 = ssub.s32 2048, 2048
      %41 = vsyncadd [#allocation6], %s40
      %s42 = sshll.u32 [#allocation7], 4
      %s43 = int_to_ptr.vmem [resolvable:$true] %s42
      %48 = dma.hbm_to_vmem [thread:$0]  %s3, 2048, %s43, [#allocation6], 128, 128, 8
    $region17: #{tpu_custom_call.1} parent=1 // pred_fallthru
      _
    // Predicated region
    $region18: #{tpu_custom_call.1} parent=1 // pred_check
      _
    $region19: #{tpu_custom_call.1} parent=1 // pred_check_branch
      %50 = sbr.rel (0) target = $region21
    $region20: #{tpu_custom_call.1} parent=1 // pred_region
      _
    $region21: #{tpu_custom_call.1} parent=1 // pred_fallthru
      _
    // Predicated region
    $region22: #{tpu_custom_call.1} parent=1 // pred_check
      _
    $region23: #{tpu_custom_call.1} parent=1 // pred_check_branch
      %52 = sbr.rel (0) target = $region25
    $region24: #{tpu_custom_call.1} parent=1 // pred_region
      %53 = dma.done [#allocation3], 128
    $region25: #{tpu_custom_call.1} parent=1 // pred_fallthru
      _
    // Predicated region
    $region26: #{tpu_custom_call.1} parent=1 // pred_check
      _
    $region27: #{tpu_custom_call.1} parent=1 // pred_check_branch
      %55 = sbr.rel (0) target = $region29
    $region28: #{tpu_custom_call.1} parent=1 // pred_region
      %56 = dma.done [#allocation6], 256
    $region29: #{tpu_custom_call.1} parent=1 // pred_fallthru
      _
    // Predicated region
    $region30: #{tpu_custom_call.1} parent=1 // pred_check
      _
    $region31: #{tpu_custom_call.1} parent=1 // pred_check_branch
      %58 = sbr.rel (0) target = $region33
    $region32: #{tpu_custom_call.1} parent=1 // pred_region
      %59 = dma.done [#allocation6], 2048
    $region33: #{tpu_custom_call.1} parent=1 // pred_fallthru
      _
    %v61 = vld [vmem:[#allocation2] sm:$0xff]
    %v62 = vpack.c.bf16 %v61, %v61
    %v63 = vld [vmem:[#allocation5] sm:$0xf]
    %v64 = vld [vmem:[#allocation5 + $0x4] sm:$0xf]
    %v65 = vld [vmem:[#allocation5 + $0x8] sm:$0xf]
    %v66 = vld [vmem:[#allocation5 + $0xc] sm:$0xf]
    %v67 = vld [vmem:[%s2] sm:$0x1]
    %v69 = vlaneseq
    %v70 = vshrl.u32 %v69, 7
    %v71 = vsub.s32 0, %v70
    %v72 = vrot.slane %v67, %v71
    %v78 = vunpack.c.l.b16 %v63
    %v79 = vunpack.c.l.b16 %v64
    %v80 = vunpack.c.l.b16 %v65
    %v81 = vunpack.c.l.b16 %v66
    %v82 = vpack.c.b16 %v79, %v78
    %v83 = vpack.c.b16 %v81, %v80
    %vm86 = vcmask 261120
    %v88 = vsel %vm86, %v62, 0
    %90 = vmatprep.subr.bf16.mxu0 0
    %91 = vmatpush1.bf16.msra.mxu0 %v82
    %92 = vmatprep.subr.bf16.mxu0 0
    %93 = vmatpush1.bf16.msra.mxu0 %v83
    %94 = vmatprep.subr.bf16.mxu0 0
    %95 = vmatpush1.bf16.msra.mxu0 0
    %96 = vmatprep.subr.bf16.mxu0 0
    %97 = vmatpush1.bf16.msra.mxu0 0
    %98 = vmatprep.subr.bf16.mxu0 0
    %99 = vmatpush1.bf16.msra.mxu0 0
    %100 = vmatprep.subr.bf16.mxu0 0
    %101 = vmatpush1.bf16.msra.mxu0 0
    %102 = vmatprep.subr.bf16.mxu0 0
    %103 = vmatpush1.bf16.msra.mxu0 0
    %104 = vmatprep.subr.bf16.mxu0 0
    %105 = vmatpush1.bf16.msra.mxu0 0
    %106 = vmatprep.subr.bf16.mxu0 0
    %107 = vmatpush1.bf16.msra.mxu0 0
    %108 = vmatprep.subr.bf16.mxu0 0
    %109 = vmatpush1.bf16.msra.mxu0 0
    %110 = vmatprep.subr.bf16.mxu0 0
    %111 = vmatpush1.bf16.msra.mxu0 0
    %112 = vmatprep.subr.bf16.mxu0 0
    %113 = vmatpush1.bf16.msra.mxu0 0
    %114 = vmatprep.subr.bf16.mxu0 0
    %115 = vmatpush1.bf16.msra.mxu0 0
    %116 = vmatprep.subr.bf16.mxu0 0
    %117 = vmatpush1.bf16.msra.mxu0 0
    %118 = vmatprep.subr.bf16.mxu0 0
    %119 = vmatpush1.bf16.msra.mxu0 0
    %120 = vmatprep.subr.bf16.mxu0 0
    %121 = vmatpush1.bf16.msra.mxu0 0
    %122 = vmatprep.mubr.bf16.mxu0 0
    %123 = vmatmul.mubr.bf16.gmra.mrb[0].mxu0 %v88
    %v124 = vpop.f32.mrb[0].mxu0
    %v125 = vadd.f32 %v72, %v124
    %v126 = vpop.f32.mrb[0].mxu0
    %v127 = vpop.f32.mrb[0].mxu0
    %v128 = vpop.f32.mrb[0].mxu0
    %129 = vdwg.mxu0
    %v130 = vmax.f32 %v125, 0.0
    %v131 = vld [vmem:[#allocation7] sm:$0xff]
    %v132 = vld [vmem:[#allocation7 + $0x8] sm:$0xff]
    %v133 = vld [vmem:[#allocation7 + $0x10] sm:$0xff]
    %v134 = vld [vmem:[#allocation7 + $0x18] sm:$0xff]
    %v135 = vld [vmem:[#allocation7 + $0x20] sm:$0xff]
    %v136 = vld [vmem:[#allocation7 + $0x28] sm:$0xff]
    %v137 = vld [vmem:[#allocation7 + $0x30] sm:$0xff]
    %v138 = vld [vmem:[#allocation7 + $0x38] sm:$0xff]
    %v139 = vld [vmem:[#allocation7 + $0x40] sm:$0xff]
    %v140 = vld [vmem:[#allocation7 + $0x48] sm:$0xff]
    %v141 = vld [vmem:[#allocation7 + $0x50] sm:$0xff]
    %v142 = vld [vmem:[#allocation7 + $0x58] sm:$0xff]
    %v143 = vld [vmem:[#allocation7 + $0x60] sm:$0xff]
    %v144 = vld [vmem:[#allocation7 + $0x68] sm:$0xff]
    %v145 = vld [vmem:[#allocation7 + $0x70] sm:$0xff]
    %v146 = vld [vmem:[#allocation7 + $0x78] sm:$0xff]
    %v147 = vld [vmem:[%s4] sm:$0x1]
    %v149 = vlaneseq
    %v150 = vshrl.u32 %v149, 7
    %v151 = vsub.s32 0, %v150
    %v152 = vrot.slane %v147, %v151
    %154 = vmatprep.subr.mxu0 0.0
    %155 = vmatpush1.msra.mxu0 %v131
    %156 = vmatprep.subr.mxu0 0.0
    %157 = vmatpush1.msra.mxu0 %v132
    %158 = vmatprep.subr.mxu0 0.0
    %159 = vmatpush1.msra.mxu0 %v133
    %160 = vmatprep.subr.mxu0 0.0
    %161 = vmatpush1.msra.mxu0 %v134
    %162 = vmatprep.subr.mxu0 0.0
    %163 = vmatpush1.msra.mxu0 %v135
    %164 = vmatprep.subr.mxu0 0.0
    %165 = vmatpush1.msra.mxu0 %v136
    %166 = vmatprep.subr.mxu0 0.0
    %167 = vmatpush1.msra.mxu0 %v137
    %168 = vmatprep.subr.mxu0 0.0
    %169 = vmatpush1.msra.mxu0 %v138
    %170 = vmatprep.subr.mxu0 0.0
    %171 = vmatpush1.msra.mxu0 %v139
    %172 = vmatprep.subr.mxu0 0.0
    %173 = vmatpush1.msra.mxu0 %v140
    %174 = vmatprep.subr.mxu0 0.0
    %175 = vmatpush1.msra.mxu0 %v141
    %176 = vmatprep.subr.mxu0 0.0
    %177 = vmatpush1.msra.mxu0 %v142
    %178 = vmatprep.subr.mxu0 0.0
    %179 = vmatpush1.msra.mxu0 %v143
    %180 = vmatprep.subr.mxu0 0.0
    %181 = vmatpush1.msra.mxu0 %v144
    %182 = vmatprep.subr.mxu0 0.0
    %183 = vmatpush1.msra.mxu0 %v145
    %184 = vmatprep.subr.mxu0 0.0
    %185 = vmatpush1.msra.mxu0 %v146
    %186 = vmatprep.subr.mxu0 0.0
    %187 = vmatpush1.msra.mxu0 0.0
    %188 = vmatprep.subr.mxu0 0.0
    %189 = vmatpush1.msra.mxu0 0.0
    %190 = vmatprep.subr.mxu0 0.0
    %191 = vmatpush1.msra.mxu0 0.0
    %192 = vmatprep.subr.mxu0 0.0
    %193 = vmatpush1.msra.mxu0 0.0
    %194 = vmatprep.subr.mxu0 0.0
    %195 = vmatpush1.msra.mxu0 0.0
    %196 = vmatprep.subr.mxu0 0.0
    %197 = vmatpush1.msra.mxu0 0.0
    %198 = vmatprep.subr.mxu0 0.0
    %199 = vmatpush1.msra.mxu0 0.0
    %200 = vmatprep.subr.mxu0 0.0
    %201 = vmatpush1.msra.mxu0 0.0
    %202 = vmatprep.subr.mxu0 0.0
    %203 = vmatpush1.msra.mxu0 0.0
    %204 = vmatprep.subr.mxu0 0.0
    %205 = vmatpush1.msra.mxu0 0.0
    %206 = vmatprep.subr.mxu0 0.0
    %207 = vmatpush1.msra.mxu0 0.0
    %208 = vmatprep.subr.mxu0 0.0
    %209 = vmatpush1.msra.mxu0 0.0
    %210 = vmatprep.subr.mxu0 0.0
    %211 = vmatpush1.msra.mxu0 0.0
    %212 = vmatprep.subr.mxu0 0.0
    %213 = vmatpush1.msra.mxu0 0.0
    %214 = vmatprep.subr.mxu0 0.0
    %215 = vmatpush1.msra.mxu0 0.0
    %216 = vmatprep.subr.mxu0 0.0
    %217 = vmatpush1.msra.mxu0 0.0
    %218 = vmatprep.mubr.f32.mxu0 0.0
    %219 = vmatmul.mubr.f32.gmra.mrb[0].mxu0 %v130
    %v220 = vpop.f32.mrb[0].mxu0
    %v221 = vadd.f32 %v152, %v220
    %v222 = vpop.f32.mrb[0].mxu0
    %223 = vdwg.mxu0
    %224 = vmax.xlane.f32.xlu0 %v221
    %v225 = vpop.xlane.xlu0 %224
    %v226 = vsub.f32 %v221, %v225
    %v227 = vmul.f32 %v226, 1.442695
    %v228 = vpow.pop %v227
    %229 = vadd.xlane.f32.xlu0 %v228
    %v230 = vpop.xlane.xlu0 %229
    %v231 = vrcp.pop %v230
    %v232 = vmul.f32 %v228, %v231
    %233 = vst [vmem:[#allocation8] sm:$0xff] %v232
    // Predicated region
    $region34: #{tpu_custom_call.1} parent=1 // pred_check
      _
    $region35: #{tpu_custom_call.1} parent=1 // pred_check_branch
      %235 = sbr.rel (0) target = $region37
    $region36: #{tpu_custom_call.1} parent=1 // pred_region
      %s237 = ssub.s32 128, 128
      %238 = vsyncadd [#allocation4], %s237
      %s240 = sshll.u32 [#allocation8], 4
      %s241 = int_to_ptr.vmem [resolvable:$true] %s240
      %243 = dma.vmem_to_hbm [thread:$0]  %s241, 128, %s5, [#allocation4]
    $region37: #{tpu_custom_call.1} parent=1 // pred_fallthru
      _
    // Predicated region
    $region38: #{tpu_custom_call.1} parent=1 // pred_check
      _
    $region39: #{tpu_custom_call.1} parent=1 // pred_check_branch
      %245 = sbr.rel (0) target = $region41
    $region40: #{tpu_custom_call.1} parent=1 // pred_region
      %246 = dma.done [#allocation4], 128
    $region41: #{tpu_custom_call.1} parent=1 // pred_fallthru
      _
    %247 = vsyncpa [#allocation3], 1
    %248 = vsyncpa [#allocation6], 1
    %249 = vsyncpa [#allocation4], 1

</llo_original>
